<compile_context>
chip_gen: v6e
topology: v6e:2x2x1
jax: 0.10.0
libtpu: 0.0.40
codegen_flags: <defaults>
</compile_context>

<pallas_src>
import math

import jax
import jax.numpy as jnp
from jax import lax
from jax.experimental import pallas as pl
from jax.experimental.pallas import tpu as pltpu


def _sphere_rows_kernel(x_ref, o_ref):
    """One vector per row: plain cross-lane (XLU) reduction over the last dim."""
    x = x_ref[...].astype(jnp.float32)
    ss = jnp.sum(x * x, axis=-1, keepdims=True)                      # (T, 1)
    o_ref[...] = (x * lax.rsqrt(ss)).astype(o_ref.dtype)


def _sphere_packed_kernel(mask_ref, x_ref, o_ref):
    """k vectors packed per lane-dense row; per-segment sum of squares computed
    as (x*x) @ M with a block-diagonal 0/1 bf16 mask on the MXU.  The mask is
    loop-invariant and supplied from the wrapper (DMA'd once, resident across
    grid steps).  bf16 hi/lo split keeps ~f32 accuracy on the bf16 MXU path."""
    xsq = jnp.square(x_ref[...].astype(jnp.float32))                 # (T, L) f32
    hi = xsq.astype(jnp.bfloat16)
    lo = (xsq - hi.astype(jnp.float32)).astype(jnp.bfloat16)
    mask = mask_ref[...]                                             # (L, L) bf16
    ss = (jnp.dot(hi, mask, preferred_element_type=jnp.float32)
          + jnp.dot(lo, mask, preferred_element_type=jnp.float32))   # (T, L)
    # Re-read x_ref (VMEM reload is ~free at 3 vld/cycle) so the f32 upcast of x
    # is not live across the two MXU dots -> one fewer full-tile f32 buffer.
    o_ref[...] = (x_ref[...].astype(jnp.float32) * lax.rsqrt(ss)).astype(o_ref.dtype)


def sphere(x):
    """Pallas implementation of Sphere.forward (dim=-1)."""
    orig_shape = x.shape
    orig_dtype = x.dtype
    D = int(orig_shape[-1])
    x2d = x.reshape(-1, D)
    rows = int(x2d.shape[0])
    itemsize = int(jnp.dtype(orig_dtype).itemsize)

    # ---- lane-dense packing (free metadata reshape) -------------------------
    # Fold k = lcm(D, 128)//D consecutive vectors per row whenever that divides
    # the row count, so the stored minor dim is a multiple of 128 lanes.  Cap
    # the packed width so the (L, L) mask / MXU work stays small.
    L_CAP = 512
    k = 1
    if D > 0 and D % 128 != 0:
        L_try = (D * 128) // math.gcd(D, 128)          # lcm(D, 128)
        k_try = L_try // D
        if k_try > 1 and L_try <= L_CAP and rows % k_try == 0:
            k = k_try
    p_rows = rows // k
    p_cols = k * D
    xp = x2d.reshape(p_rows, p_cols)
    packed = k > 1

    # ---- device-aware tile / VMEM sizing ------------------------------------
    try:
        vmem_cap = int(pltpu.get_tpu_info().vmem_capacity_bytes)
    except Exception:  # pragma: no cover - conservative fallback
        vmem_cap = 64 * 1024 * 1024                    # assume v7x (smallest)
    big_vmem = vmem_cap >= 100 * 1024 * 1024           # v5e / v6e: 128 MiB
    vmem_cap_limit = (96 if big_vmem else 48) * 1024 * 1024
    # per-block target measured in f32-equivalent bytes (temps dominate)
    target_f32_bytes = (6 if big_vmem else 4) * 1024 * 1024

    # sublane multiple native to the dtype (8 f32 / 16 bf16 / 32 int8-fp8)
    sublane = max(8, 32 // itemsize)

    rows_per_block = max(1, target_f32_bytes // (p_cols * 4))
    if p_rows <= sublane:
        tile_rows = p_rows                              # tiny input: single step
    else:
        tile_rows = min(p_rows, max(sublane, (rows_per_block // sublane) * sublane))
        # Never collapse to a single grid step when the input can be split:
        # >= 2 blocks lets ("parallel",) shard across both v7x TensorCores.
        if pl.cdiv(p_rows, tile_rows) < 2 and p_rows >= 2 * sublane:
            half = pl.cdiv(p_rows, 2)
            tile_rows = ((half + sublane - 1) // sublane) * sublane
        # Prefer an even block count for 2-core load balance (best effort).
        nb = pl.cdiv(p_rows, tile_rows)
        if nb > 2 and nb % 2 == 1:
            nb += 1
            tile_rows = max(sublane,
                            ((pl.cdiv(p_rows, nb) + sublane - 1) // sublane) * sublane)
    grid = (pl.cdiv(p_rows, tile_rows),)

    # VMEM budget: double-buffered native-dtype I/O + in-kernel f32/bf16 temps
    # (+ the resident mask in the packed path), capped per generation.
    io_block = tile_rows * p_cols * itemsize
    f32_block = tile_rows * p_cols * 4
    mask_bytes = (p_cols * p_cols * 2) if packed else 0
    temps = (5 if packed else 3) * f32_block
    vmem_limit = int(min(vmem_cap_limit,
                         max(32 * 1024 * 1024,
                             4 * io_block + temps + 2 * mask_bytes + (4 << 20))))

    x_spec = pl.BlockSpec((tile_rows, p_cols), lambda i: (i, 0))
    o_spec = pl.BlockSpec((tile_rows, p_cols), lambda i: (i, 0))
    cp = pltpu.CompilerParams(dimension_semantics=("parallel",),
                              vmem_limit_bytes=vmem_limit)
    out_shape = jax.ShapeDtypeStruct((p_rows, p_cols), orig_dtype)

    if packed:
        # Block-diagonal ones mask: column j belongs to segment j // D.
        seg = jnp.arange(p_cols, dtype=jnp.int32) // D
        mask = (seg[:, None] == seg[None, :]).astype(jnp.bfloat16)   # (L, L)
        out = pl.pallas_call(
            _sphere_packed_kernel,
            out_shape=out_shape,
            grid=grid,
            in_specs=[pl.BlockSpec((p_cols, p_cols), lambda i: (0, 0)),  # resident
                      x_spec],
            out_specs=o_spec,
            compiler_params=cp,
        )(mask, xp)
    else:
        out = pl.pallas_call(
            _sphere_rows_kernel,
            out_shape=out_shape,
            grid=grid,
            in_specs=[x_spec],
            out_specs=o_spec,
            compiler_params=cp,
        )(xp)
    return out.reshape(orig_shape)


if __name__ == "__main__":
    key = jax.random.PRNGKey(0)
    # small shape: batch=2, channels=4, spatial=16, hidden=32; normalize over last dim
    x = jax.random.normal(key, (2, 4, 16, 32), dtype=jnp.float32)

    y = sphere(x)
    y = jax.block_until_ready(y)

    # self-check against plain-JAX reference (matches torch: x / x.norm(dim=-1, keepdim=True))
    ref = x / jnp.linalg.norm(x, axis=-1, keepdims=True)
    assert y.shape == x.shape and y.dtype == x.dtype
    assert jnp.allclose(y, ref, atol=1e-5, rtol=1e-5)

    # secondary check: unpacked (row-reduction) path, D multiple of 128
    x2 = jax.random.normal(jax.random.PRNGKey(1), (2, 4, 8, 256), dtype=jnp.float32)
    y2 = jax.block_until_ready(sphere(x2))
    ref2 = x2 / jnp.linalg.norm(x2, axis=-1, keepdims=True)
    assert jnp.allclose(y2, ref2, atol=1e-5, rtol=1e-5)

    print("KERNEL_OK")
</pallas_src>

<mosaic_0001>
module attributes {stable_mosaic.version = 11 : i64} {
  func.func @_sphere_packed_kernel(%arg0: i32, %arg1: memref<128x128xbf16, #tpu.memory_space<vmem>>, %arg2: memref<16x128xf32, #tpu.memory_space<vmem>>, %arg3: memref<16x128xf32, #tpu.memory_space<vmem>>) attributes {dimension_semantics = [#tpu.dimension_semantics<parallel>], iteration_bounds = array<i64: 2>, scalar_prefetch = 0 : i64, scratch_operands = 0 : i64, tpu.core_type = #tpu.core_type<tc>, window_params = [{pipeline_mode = #tpu.pipeline_mode<synchronous>, transform_indices = @transform_0, window_bounds = array<i64: 128, 128>}, {transform_indices = @transform_1, window_bounds = array<i64: 16, 128>}, {transform_indices = @transform_2, window_bounds = array<i64: 16, 128>}]} {
    %c0 = arith.constant 0 : index
    %c0_0 = arith.constant 0 : index
    %0 = vector.load %arg2[%c0, %c0_0] : memref<16x128xf32, #tpu.memory_space<vmem>>, vector<16x128xf32>
    %1 = arith.mulf %0, %0 : vector<16x128xf32>
    %2 = arith.truncf %1 : vector<16x128xf32> to vector<16x128xbf16>
    %3 = arith.extf %2 : vector<16x128xbf16> to vector<16x128xf32>
    %4 = arith.subf %1, %3 : vector<16x128xf32>
    %5 = arith.truncf %4 : vector<16x128xf32> to vector<16x128xbf16>
    %c0_1 = arith.constant 0 : index
    %c0_2 = arith.constant 0 : index
    %6 = vector.load %arg1[%c0_1, %c0_2] : memref<128x128xbf16, #tpu.memory_space<vmem>>, vector<128x128xbf16>
    %cst = arith.constant dense<0.000000e+00> : vector<16x128xf32>
    %7 = tpu.matmul %2, %6, %cst {dimension_numbers = #tpu.dot_dimension_numbers<[1], [0], [0], [1], [0, 0, 1, 1], [], []>} : vector<16x128xbf16>, vector<128x128xbf16>, vector<16x128xf32> -> vector<16x128xf32>
    %cst_3 = arith.constant dense<0.000000e+00> : vector<16x128xf32>
    %8 = tpu.matmul %5, %6, %cst_3 {dimension_numbers = #tpu.dot_dimension_numbers<[1], [0], [0], [1], [0, 0, 1, 1], [], []>} : vector<16x128xbf16>, vector<128x128xbf16>, vector<16x128xf32> -> vector<16x128xf32>
    %9 = arith.addf %7, %8 : vector<16x128xf32>
    %c0_4 = arith.constant 0 : index
    %c0_5 = arith.constant 0 : index
    %10 = vector.load %arg2[%c0_4, %c0_5] : memref<16x128xf32, #tpu.memory_space<vmem>>, vector<16x128xf32>
    %11 = math.rsqrt %9 : vector<16x128xf32>
    %12 = arith.mulf %10, %11 : vector<16x128xf32>
    %c0_6 = arith.constant 0 : index
    %c0_7 = arith.constant 0 : index
    %13 = vector.load %arg3[%c0_6, %c0_7] : memref<16x128xf32, #tpu.memory_space<vmem>>, vector<16x128xf32>
    tpu.vector_store %arg3[%c0_6, %c0_7], %12 {strides = array<i32>} : memref<16x128xf32, #tpu.memory_space<vmem>>, vector<16x128xf32>,
    return
  }
  func.func @transform_0(%arg0: i32) -> (i32, i32) {
    %c0_i32 = arith.constant 0 : i32
    %c0_i32_0 = arith.constant 0 : i32
    %c0_i32_1 = arith.constant 0 : i32
    return %c0_i32, %c0_i32_0 : i32, i32
  }
  func.func @transform_1(%arg0: i32) -> (i32, i32) {
    %c0_i32 = arith.constant 0 : i32
    %c0_i32_0 = arith.constant 0 : i32
    return %arg0, %c0_i32 : i32, i32
  }
  func.func @transform_2(%arg0: i32) -> (i32, i32) {
    %c0_i32 = arith.constant 0 : i32
    %c0_i32_0 = arith.constant 0 : i32
    return %arg0, %c0_i32 : i32, i32
  }
}

</mosaic_0001>

<llo_original>
// kernel: tpu_custom_call.1
$region0: #{tpu_custom_call.1}
  #allocation0 [shape = 'u32[]', space=smem, size = 0x4, offset = 0x4, fixed_abs, tag = 'smem constant byte address 0x4 - core index']
  #allocation1 [shape = 'u32[144,128]{1,0:T(1,128)}', space=vmem, size = 0x12000, scoped, tag = 'internal scratch']
  %s0 = inlined_call_operand.hbm [shape: bf16[128,128], index: 0, kind: input, shape index: {}]
  %s1 = inlined_call_operand.hbm [shape: f32[32,128], index: 1, kind: input, shape index: {}]
  %s2 = inlined_call_operand.hbm [shape: f32[32,128], index: 2, kind: output, shape index: {}]
  %s3 = sld [smem:[#allocation0]]
  $region49: #{tpu_custom_call.1} parent=0
    _
  %s5 = ssub.s32 1, %s3
  %s6 = scalar_select 0, %s5, %s3
  $region1: #{tpu_custom_call.1} parent=0
    #allocation2 [shape = 'u8[32768]{0}', space=vmem, size = 0x8000, scoped, tag = 'input window, operand 0, single buffered']
    #allocation3 [shape = 's32[2]{0}', space=sflag, size = 0x8, scoped, tag = 'scoped memory for tpu_custom_call.1']
    #allocation4 [shape = 's32[2]{0}', space=sflag, size = 0x8, scoped, tag = 'scoped memory for tpu_custom_call.1']
    #allocation5 [shape = 'u8[16384]{0}', space=vmem, size = 0x4000, scoped, tag = 'input window, operand 1']
    #allocation6 [shape = 's32[2]{0}', space=sflag, size = 0x8, scoped, tag = 'scoped memory for tpu_custom_call.1']
    #allocation7 [shape = 'u8[16384]{0}', space=vmem, size = 0x4000, scoped, tag = 'output window, operand 0']
    %7 = vsyncpa [#allocation3], 0
    %8 = vsyncpa [#allocation6], 0
    %s9 = scalar_lea.sflag [#allocation6], 1
    %10 = vsyncpa %s9, 0
    %11 = vsyncpa [#allocation4], 0
    %s12 = scalar_lea.sflag [#allocation4], 1
    %13 = vsyncpa %s12, 0
    loop: start=0, step=1, limit=4
    $region2: #{tpu_custom_call.1} parent=1 // loop_pre_header
      _
    $region3: #{tpu_custom_call.1} parent=1 // loop_header
      %s15 = sphi 0, %s19
      %p16 = scmp.ge.s32.totalorder %s15, 4
      %s23 = sphi 0, %s23
      %s25 = sphi 0, %s23
      %s26 = sphi 0, %s25
      %s40 = sphi 0, %s26
      %s46 = sphi 0, %s48
      %s49 = sphi 0, %s46
      %s50 = sphi 0, %s49
      %s66 = sphi 0, %s50
      %s72 = sphi 0, %s74
      %s75 = sphi 0, %s72
      %s76 = sphi 0, %s75
      %s92 = sphi 0, %s76
    $region4: #{tpu_custom_call.1} parent=1 // loop_header_branch
      %18 = sbr.rel (%p16) target = $region8
    $region5: #{tpu_custom_call.1} parent=1 // loop_body
      %s20 = ssub.s32 %s15, 1
      %s21 = ssub.s32 %s15, 2
      %s22 = sadd.s32 %s15, 1
      %s24 = sadd.s32 %s23, 1
      %p27 = scmp.eq.s32.totalorder %s15, 1
      %p28 = scmp.ne.s32.totalorder %s23, %s25
      %p29 = scmp.eq.s32.totalorder %s15, 0
      %p30 = por %p28, %p29
      %p31 = scmp.ne.s32.totalorder %s23, %s25
      %p32 = scmp.eq.s32.totalorder %s20, 1
      %p33 = por %p31, %p32
      %p34 = scmp.ne.s32.totalorder %s25, %s26
      %p35 = scmp.eq.s32.totalorder %s20, 0
      %p36 = por %p34, %p35
      %p37 = scmp.ne.s32.totalorder %s25, %s26
      %p38 = scmp.eq.s32.totalorder %s21, 1
      %p39 = por %p37, %p38
      %p41 = scmp.ne.s32.totalorder %s26, %s40
      %p42 = scmp.eq.s32.totalorder %s21, 0
      %p43 = por %p41, %p42
      %s44 = ssub.s32 %s15, %s22
      %p45 = scmp.eq.s32.totalorder %s44, 0
      %s47 = sadd.s32 %s46, 1
      %s48 = scalar_select %p45, %s46, %s47
      %p51 = pneg %p45
      %p52 = scmp.eq.s32.totalorder %s15, 1
      %p53 = por %p51, %p52
      %p54 = scmp.ne.s32.totalorder %s46, %s49
      %p55 = scmp.eq.s32.totalorder %s15, 0
      %p56 = por %p54, %p55
      %p57 = scmp.ne.s32.totalorder %s46, %s49
      %p58 = scmp.eq.s32.totalorder %s20, 1
      %p59 = por %p57, %p58
      %p60 = scmp.ne.s32.totalorder %s49, %s50
      %p61 = scmp.eq.s32.totalorder %s20, 0
      %p62 = por %p60, %p61
      %p63 = scmp.ne.s32.totalorder %s49, %s50
      %p64 = scmp.eq.s32.totalorder %s21, 1
      %p65 = por %p63, %p64
      %p67 = scmp.ne.s32.totalorder %s50, %s66
      %p68 = scmp.eq.s32.totalorder %s21, 0
      %p69 = por %p67, %p68
      %s70 = ssub.s32 %s15, %s22
      %p71 = scmp.eq.s32.totalorder %s70, 0
      %s73 = sadd.s32 %s72, 1
      %s74 = scalar_select %p71, %s72, %s73
      %p77 = pneg %p71
      %p78 = scmp.eq.s32.totalorder %s15, 1
      %p79 = por %p77, %p78
      %p80 = scmp.ne.s32.totalorder %s72, %s75
      %p81 = scmp.eq.s32.totalorder %s15, 0
      %p82 = por %p80, %p81
      %p83 = scmp.ne.s32.totalorder %s72, %s75
      %p84 = scmp.eq.s32.totalorder %s20, 1
      %p85 = por %p83, %p84
      %p86 = scmp.ne.s32.totalorder %s75, %s76
      %p87 = scmp.eq.s32.totalorder %s20, 0
      %p88 = por %p86, %p87
      %p89 = scmp.ne.s32.totalorder %s75, %s76
      %p90 = scmp.eq.s32.totalorder %s21, 1
      %p91 = por %p89, %p90
      %p93 = scmp.ne.s32.totalorder %s76, %s92
      %p94 = scmp.eq.s32.totalorder %s21, 0
      %p95 = por %p93, %p94
      %p96 = scmp.le.s32.totalorder 1, %s15
      %p97 = scmp.lt.s32.totalorder %s15, 3
      %p98 = pnand %p96, %p97
      %p99 = pneg %p98
      // Predicated region
      $region9: #{tpu_custom_call.1} parent=5 // pred_check
        _
      $region10: #{tpu_custom_call.1} parent=5 // pred_check_branch
        %101 = sbr.rel (%p98) target = $region12
      $region11: #{tpu_custom_call.1} parent=5 // pred_region
        %s102 = ssub.s32 %s15, 1
        // Predicated region
        $region13: #{tpu_custom_call.1} parent=11 // pred_check
          %p103 = pneg %p36
        $region14: #{tpu_custom_call.1} parent=11 // pred_check_branch
          %105 = sbr.rel (%p103) target = $region16
        $region15: #{tpu_custom_call.1} parent=11 // pred_region
          %s107 = ssub.s32 1024, 1024
          %108 = vsyncadd [#allocation3], %s107
          %s109 = sshll.u32 [#allocation2], 4
          %s110 = int_to_ptr.vmem [resolvable:$true] %s109
          %115 = dma.hbm_to_vmem [thread:$0]  %s0, 1024, %s110, [#allocation3], 64, 64, 4
        $region16: #{tpu_custom_call.1} parent=11 // pred_fallthru
          _
      $region12: #{tpu_custom_call.1} parent=5 // pred_fallthru
        _
      %p116 = scmp.lt.s32.totalorder %s15, 2
      // Predicated region
      $region17: #{tpu_custom_call.1} parent=5 // pred_check
        %p117 = pneg %p116
      $region18: #{tpu_custom_call.1} parent=5 // pred_check_branch
        %119 = sbr.rel (%p117) target = $region20
      $region19: #{tpu_custom_call.1} parent=5 // pred_region
        // Predicated region
        $region21: #{tpu_custom_call.1} parent=19 // pred_check
          %p120 = pneg %p56
        $region22: #{tpu_custom_call.1} parent=19 // pred_check_branch
          %122 = sbr.rel (%p120) target = $region24
        $region23: #{tpu_custom_call.1} parent=19 // pred_region
          %s123 = sand.u32 %s46, 1
          %s124 = scalar_lea.sflag [#allocation6], %s123
          %s125 = sand.u32 %s46, 1
          %s126 = smul.addr %s125, 16
          %s127 = scalar_lea.vmem [#allocation5], %s126
          %s128 = smul.u32 2, %s15
          %s130 = ssub.s32 256, 256
          %131 = vsyncadd %s124, %s130
          %s132 = smul.addr %s128, 128
          %s133 = scalar_lea.hbm %s1, %s132
          %s134 = sshll.u32 %s127, 4
          %s135 = int_to_ptr.vmem [resolvable:$true] %s134
          %140 = dma.hbm_to_vmem [thread:$0]  %s133, 256, %s135, %s124, 128, 128, 8
        $region24: #{tpu_custom_call.1} parent=19 // pred_fallthru
          _
      $region20: #{tpu_custom_call.1} parent=5 // pred_fallthru
        _
      %p141 = scmp.le.s32.totalorder 1, %s15
      %p142 = scmp.lt.s32.totalorder %s15, 3
      %p143 = pnand %p141, %p142
      %p144 = pneg %p143
      // Predicated region
      $region25: #{tpu_custom_call.1} parent=5 // pred_check
        _
      $region26: #{tpu_custom_call.1} parent=5 // pred_check_branch
        %146 = sbr.rel (%p143) target = $region28
      $region27: #{tpu_custom_call.1} parent=5 // pred_region
        %s147 = ssub.s32 %s15, 1
        // Predicated region
        $region29: #{tpu_custom_call.1} parent=27 // pred_check
          %p148 = pneg %p36
        $region30: #{tpu_custom_call.1} parent=27 // pred_check_branch
          %150 = sbr.rel (%p148) target = $region32
        $region31: #{tpu_custom_call.1} parent=27 // pred_region
          %151 = dma.done [#allocation3], 1024
        $region32: #{tpu_custom_call.1} parent=27 // pred_fallthru
          _
        %s152 = sand.u32 %s49, 1
        %s153 = scalar_lea.sflag [#allocation6], %s152
        %s154 = sand.u32 %s49, 1
        %s155 = smul.addr %s154, 16
        %s156 = scalar_lea.vmem [#allocation5], %s155
        // Predicated region
        $region33: #{tpu_custom_call.1} parent=27 // pred_check
          %p157 = pneg %p62
        $region34: #{tpu_custom_call.1} parent=27 // pred_check_branch
          %159 = sbr.rel (%p157) target = $region36
        $region35: #{tpu_custom_call.1} parent=27 // pred_region
          %160 = dma.done %s153, 256
        $region36: #{tpu_custom_call.1} parent=27 // pred_fallthru
          _
        %p161 = pneg %p36
        %p162 = pneg %p33
        %s163 = sand.u32 %s49, 1
        %s164 = scalar_lea.sflag [#allocation6], %s163
        %s165 = sand.u32 %s49, 1
        %s166 = smul.addr %s165, 16
        %s167 = scalar_lea.vmem [#allocation5], %s166
        %p168 = pneg %p62
        %p169 = pneg %p59
        %p170 = pneg %p88
        %p171 = pneg %p85
        %s172 = sand.u32 %s75, 1
        %s173 = scalar_lea.sflag [#allocation4], %s172
        %s174 = sand.u32 %s75, 1
        %s175 = smul.addr %s174, 16
        %s176 = scalar_lea.vmem [#allocation7], %s175
        %s177 = smul.u32 2, %s20
        %s178 = smul.u32 2, %s20
        %v180 = vld [vmem:[%s156] sm:$0xff]
        %v181 = vld [vmem:[%s156 + $0x8] sm:$0xff]
        %v182 = vmul.f32 %v180, %v180
        %v183 = vmul.f32 %v181, %v181
        %v184 = vpack.c.bf16 %v183, %v182
        %v185 = vunpack.c.l.bf16 %v184
        %v186 = vunpack.c.h.bf16 %v184
        %v187 = vsub.f32 %v182, %v185
        %v188 = vsub.f32 %v183, %v186
        %v189 = vpack.c.bf16 %v188, %v187
        %v190 = vld [vmem:[#allocation2] sm:$0xf]
        %v191 = vld [vmem:[#allocation2 + $0x4] sm:$0xf]
        %v192 = vld [vmem:[#allocation2 + $0x8] sm:$0xf]
        %v193 = vld [vmem:[#allocation2 + $0xc] sm:$0xf]
        %v194 = vld [vmem:[#allocation2 + $0x10] sm:$0xf]
        %v195 = vld [vmem:[#allocation2 + $0x14] sm:$0xf]
        %v196 = vld [vmem:[#allocation2 + $0x18] sm:$0xf]
        %v197 = vld [vmem:[#allocation2 + $0x1c] sm:$0xf]
        %v198 = vld [vmem:[#allocation2 + $0x20] sm:$0xf]
        %v199 = vld [vmem:[#allocation2 + $0x24] sm:$0xf]
        %v200 = vld [vmem:[#allocation2 + $0x28] sm:$0xf]
        %v201 = vld [vmem:[#allocation2 + $0x2c] sm:$0xf]
        %v202 = vld [vmem:[#allocation2 + $0x30] sm:$0xf]
        %v203 = vld [vmem:[#allocation2 + $0x34] sm:$0xf]
        %v204 = vld [vmem:[#allocation2 + $0x38] sm:$0xf]
        %v205 = vld [vmem:[#allocation2 + $0x3c] sm:$0xf]
        %v222 = vunpack.c.l.b16 %v190
        %v223 = vunpack.c.l.b16 %v191
        %v224 = vunpack.c.l.b16 %v192
        %v225 = vunpack.c.l.b16 %v193
        %v226 = vunpack.c.l.b16 %v194
        %v227 = vunpack.c.l.b16 %v195
        %v228 = vunpack.c.l.b16 %v196
        %v229 = vunpack.c.l.b16 %v197
        %v230 = vunpack.c.l.b16 %v198
        %v231 = vunpack.c.l.b16 %v199
        %v232 = vunpack.c.l.b16 %v200
        %v233 = vunpack.c.l.b16 %v201
        %v234 = vunpack.c.l.b16 %v202
        %v235 = vunpack.c.l.b16 %v203
        %v236 = vunpack.c.l.b16 %v204
        %v237 = vunpack.c.l.b16 %v205
        %v238 = vpack.c.b16 %v223, %v222
        %v239 = vpack.c.b16 %v225, %v224
        %v240 = vpack.c.b16 %v227, %v226
        %v241 = vpack.c.b16 %v229, %v228
        %v242 = vpack.c.b16 %v231, %v230
        %v243 = vpack.c.b16 %v233, %v232
        %v244 = vpack.c.b16 %v235, %v234
        %v245 = vpack.c.b16 %v237, %v236
        %254 = vmatprep.subr.bf16.mxu0 0
        %255 = vmatpush1.bf16.msra.mxu0 %v245
        %256 = vmatprep.subr.bf16.mxu0 0
        %257 = vmatpush1.bf16.msra.mxu0 %v244
        %258 = vmatprep.subr.bf16.mxu0 0
        %259 = vmatpush1.bf16.msra.mxu0 %v243
        %260 = vmatprep.subr.bf16.mxu0 0
        %261 = vmatpush1.bf16.msra.mxu0 %v242
        %262 = vmatprep.subr.bf16.mxu0 0
        %263 = vmatpush1.bf16.msra.mxu0 %v241
        %264 = vmatprep.subr.bf16.mxu0 0
        %265 = vmatpush1.bf16.msra.mxu0 %v240
        %266 = vmatprep.subr.bf16.mxu0 0
        %267 = vmatpush1.bf16.msra.mxu0 %v239
        %268 = vmatprep.subr.bf16.mxu0 0
        %269 = vmatpush1.bf16.msra.mxu0 %v238
        %270 = vmatprep.subr.bf16.mxu0 0
        %271 = vmatpush2.bf16.msra.mxu0 0
        %272 = vmatprep.subr.bf16.mxu0 0
        %273 = vmatpush2.bf16.msra.mxu0 0
        %274 = vmatprep.subr.bf16.mxu0 0
        %275 = vmatpush2.bf16.msra.mxu0 0
        %276 = vmatprep.subr.bf16.mxu0 0
        %277 = vmatpush2.bf16.msra.mxu0 0
        %278 = vmatprep.subr.bf16.mxu0 0
        %279 = vmatpush2.bf16.msra.mxu0 0
        %280 = vmatprep.subr.bf16.mxu0 0
        %281 = vmatpush2.bf16.msra.mxu0 0
        %282 = vmatprep.subr.bf16.mxu0 0
        %283 = vmatpush2.bf16.msra.mxu0 0
        %284 = vmatprep.subr.bf16.mxu0 0
        %285 = vmatpush2.bf16.msra.mxu0 0
        %286 = vmatprep.mubr.bf16.mxu0 0
        %287 = vmatmul.mubr.bf16.gmra.mxu0 %v189
        %v288 = vpop.f32.mrf.mxu0
        %v289 = vadd.f32 0.0, %v288
        %v290 = vpop.f32.mrf.mxu0
        %v291 = vpop.f32.mrf.mxu0
        %v292 = vadd.f32 0.0, %v291
        %v293 = vpop.f32.mrf.mxu0
        %294 = vdwg.mxu0
        %295 = vmatprep.subr.bf16.mxu0 0
        %296 = vmatpush1.bf16.msra.mxu0 %v245
        %297 = vmatprep.subr.bf16.mxu0 0
        %298 = vmatpush1.bf16.msra.mxu0 %v244
        %299 = vmatprep.subr.bf16.mxu0 0
        %300 = vmatpush1.bf16.msra.mxu0 %v243
        %301 = vmatprep.subr.bf16.mxu0 0
        %302 = vmatpush1.bf16.msra.mxu0 %v242
        %303 = vmatprep.subr.bf16.mxu0 0
        %304 = vmatpush1.bf16.msra.mxu0 %v241
        %305 = vmatprep.subr.bf16.mxu0 0
        %306 = vmatpush1.bf16.msra.mxu0 %v240
        %307 = vmatprep.subr.bf16.mxu0 0
        %308 = vmatpush1.bf16.msra.mxu0 %v239
        %309 = vmatprep.subr.bf16.mxu0 0
        %310 = vmatpush1.bf16.msra.mxu0 %v238
        %311 = vmatprep.subr.bf16.mxu0 0
        %312 = vmatpush2.bf16.msra.mxu0 0
        %313 = vmatprep.subr.bf16.mxu0 0
        %314 = vmatpush2.bf16.msra.mxu0 0
        %315 = vmatprep.subr.bf16.mxu0 0
        %316 = vmatpush2.bf16.msra.mxu0 0
        %317 = vmatprep.subr.bf16.mxu0 0
        %318 = vmatpush2.bf16.msra.mxu0 0
        %319 = vmatprep.subr.bf16.mxu0 0
        %320 = vmatpush2.bf16.msra.mxu0 0
        %321 = vmatprep.subr.bf16.mxu0 0
        %322 = vmatpush2.bf16.msra.mxu0 0
        %323 = vmatprep.subr.bf16.mxu0 0
        %324 = vmatpush2.bf16.msra.mxu0 0
        %325 = vmatprep.subr.bf16.mxu0 0
        %326 = vmatpush2.bf16.msra.mxu0 0
        %327 = vmatprep.mubr.bf16.mxu0 0
        %328 = vmatmul.mubr.bf16.gmra.mxu0 %v184
        %v329 = vpop.f32.mrf.mxu0
        %v330 = vadd.f32 %v289, %v329
        %v331 = vpop.f32.mrf.mxu0
        %v332 = vpop.f32.mrf.mxu0
        %v333 = vadd.f32 %v292, %v332
        %v334 = vpop.f32.mrf.mxu0
        %335 = vdwg.mxu0
        %v336 = vrsqrt.pop %v330
        %v337 = vrsqrt.pop %v333
        %v338 = vmul.f32 %v180, %v336
        %v339 = vmul.f32 %v181, %v337
        %340 = vst [vmem:[%s176] sm:$0xff] %v338
        %341 = vst [vmem:[%s176 + $0x8] sm:$0xff] %v339
        %s342 = sand.u32 %s75, 1
        %s343 = scalar_lea.sflag [#allocation4], %s342
        %s344 = sand.u32 %s75, 1
        %s345 = smul.addr %s344, 16
        %s346 = scalar_lea.vmem [#allocation7], %s345
        // Predicated region
        $region37: #{tpu_custom_call.1} parent=27 // pred_check
          %p347 = pneg %p85
        $region38: #{tpu_custom_call.1} parent=27 // pred_check_branch
          %349 = sbr.rel (%p347) target = $region40
        $region39: #{tpu_custom_call.1} parent=27 // pred_region
          %s350 = smul.u32 2, %s20
          %s352 = ssub.s32 256, 256
          %353 = vsyncadd %s343, %s352
          %s354 = smul.addr %s350, 128
          %s355 = scalar_lea.hbm %s2, %s354
          %s356 = sshll.u32 %s346, 4
          %s357 = int_to_ptr.vmem [resolvable:$true] %s356
          %362 = dma.vmem_to_hbm [thread:$0]  %s357, 256, %s355, %s343, 128, 128, 8
        $region40: #{tpu_custom_call.1} parent=27 // pred_fallthru
          _
      $region28: #{tpu_custom_call.1} parent=5 // pred_fallthru
        _
      %p363 = scmp.le.s32.totalorder 2, %s15
      // Predicated region
      $region41: #{tpu_custom_call.1} parent=5 // pred_check
        %p364 = pneg %p363
      $region42: #{tpu_custom_call.1} parent=5 // pred_check_branch
        %366 = sbr.rel (%p364) target = $region44
      $region43: #{tpu_custom_call.1} parent=5 // pred_region
        %s367 = ssub.s32 %s15, 2
        // Predicated region
        $region45: #{tpu_custom_call.1} parent=43 // pred_check
          %p368 = pneg %p91
        $region46: #{tpu_custom_call.1} parent=43 // pred_check_branch
          %370 = sbr.rel (%p368) target = $region48
        $region47: #{tpu_custom_call.1} parent=43 // pred_region
          %s371 = sand.u32 %s76, 1
          %s372 = scalar_lea.sflag [#allocation4], %s371
          %s373 = sand.u32 %s76, 1
          %s374 = smul.addr %s373, 16
          %s375 = scalar_lea.vmem [#allocation7], %s374
          %376 = dma.done %s372, 256
        $region48: #{tpu_custom_call.1} parent=43 // pred_fallthru
          _
      $region44: #{tpu_custom_call.1} parent=5 // pred_fallthru
        _
    $region6: #{tpu_custom_call.1} parent=1 // loop_footer
      %s19 = sadd.s32 1, %s15
    $region7: #{tpu_custom_call.1} parent=1 // loop_footer_branch
      %14 = sbr.rel target = $region3
    $region8: #{tpu_custom_call.1} parent=1 // loop_exit
      _
    %377 = vsyncpa [#allocation3], 1
    %s378 = scalar_lea.sflag [#allocation3], 1
    %379 = vsyncpa %s378, 1
    %380 = vsyncpa [#allocation6], 1
    %s381 = scalar_lea.sflag [#allocation6], 1
    %382 = vsyncpa %s381, 1
    %383 = vsyncpa [#allocation4], 1
    %s384 = scalar_lea.sflag [#allocation4], 1
    %385 = vsyncpa %s384, 1

</llo_original>
